<compile_context>
chip_gen: v6e
topology: v6e:2x2x1
jax: 0.10.0
libtpu: 0.0.40
codegen_flags: <defaults>
</compile_context>

<pallas_src>
import jax
import jax.numpy as jnp
from jax import lax
from jax.experimental import pallas as pl
from jax.experimental.pallas import tpu as pltpu

LANES = 128
SUBLANES = 8
CHUNK_ROWS = 256                # per-fori_loop-step fold: (256, 128) = 32 vregs/input
TARGET_TILE_BYTES = 4 << 20     # ~4 MiB of DMA per input per grid step


def _fold_sq_diff(a_ref, b_ref, n_rows):
    """Sum of (a - b)^2 over the first `n_rows` rows of the block, folded to (8, 128).

    `n_rows` is static and a multiple of 8.  Pure VPU work: per 256-row chunk,
    2 loads + sub + mul + vreg adds; the reshape is (8, 128)-tile aligned so no
    cross-lane / XLU movement and no full-tile f32 temporaries.
    """
    def fold_rows(start, rows):
        d = (a_ref[pl.ds(start, rows), :].astype(jnp.float32)
             - b_ref[pl.ds(start, rows), :].astype(jnp.float32))
        sq = d * d
        return jnp.sum(sq.reshape(rows // SUBLANES, SUBLANES, LANES), axis=0)

    acc = jnp.zeros((SUBLANES, LANES), jnp.float32)
    full_chunks = n_rows // CHUNK_ROWS
    if full_chunks:
        def body(c, acc):
            start = pl.multiple_of(c * CHUNK_ROWS, CHUNK_ROWS)
            return acc + fold_rows(start, CHUNK_ROWS)
        acc = lax.fori_loop(0, full_chunks, body, acc, unroll=min(4, full_chunks))
    rem = n_rows % CHUNK_ROWS   # multiple of 8 by construction (slab rows padded to 8)
    if rem:
        acc = acc + fold_rows(full_chunks * CHUNK_ROWS, rem)
    return acc


def _make_mse_partial_kernel(row_tile, valid_rows):
    """Kernel writing per-block (8, 128) partial sums of (a - b)^2."""
    remainder = valid_rows % row_tile   # valid rows in the last block (0 => all full)

    def kernel(a_ref, b_ref, o_ref):
        if remainder:   # static: tail code only exists when the last block is partial
            i = pl.program_id(0)
            last = pl.num_programs(0) - 1

            @pl.when(i != last)
            def _():
                o_ref[...] = _fold_sq_diff(a_ref, b_ref, row_tile)

            @pl.when(i == last)
            def _():
                # Only the first `remainder` rows of this block were DMA'd; the
                # fold never touches the rest, so no masking is required.
                o_ref[...] = _fold_sq_diff(a_ref, b_ref, remainder)
        else:
            o_ref[...] = _fold_sq_diff(a_ref, b_ref, row_tile)

    return kernel


def encoder_loss(latent, latent_hr, *, max_tile_rows=None):
    """Equivalent of F.mse_loss(latent, latent_hr) (mean squared error)."""
    assert latent.shape == latent_hr.shape, "mse_loss (default reduction) expects equal shapes"
    n_elems = latent.size
    itemsize = latent.dtype.itemsize

    a = latent.reshape(-1)
    b = latent_hr.reshape(-1)

    # Lane-dense (m, 128) slab with m a multiple of 8.
    # TODO(synk): when n_elems % 1024 != 0 this pad is a full extra HBM copy of
    # both inputs; a lane/row-masked final block would avoid it (rare for latents).
    chunk = SUBLANES * LANES
    pad = (-n_elems) % chunk
    if pad:
        a = jnp.pad(a, (0, pad))
        b = jnp.pad(b, (0, pad))
    m = a.size // LANES          # multiple of 8 by construction
    a2 = a.reshape(m, LANES)
    b2 = b.reshape(m, LANES)

    # Dtype-aware byte-budget tile: ~TARGET_TILE_BYTES of DMA per input per step
    # (8192 rows f32, 16384 rows bf16), rounded to a CHUNK_ROWS multiple.
    if max_tile_rows is None:
        max_tile_rows = max(
            CHUNK_ROWS,
            (TARGET_TILE_BYTES // (LANES * itemsize)) // CHUNK_ROWS * CHUNK_ROWS,
        )
    row_tile = m if m <= max_tile_rows else max_tile_rows
    num_blocks = (m + row_tile - 1) // row_tile

    # Double-buffered inputs (+ tiny output blocks) must fit scoped VMEM on all
    # chips: 2 inputs x 2 buffers x 4 MiB = 16 MiB at the default tile; request
    # 32 MiB (>= every chip's default, << v7x's 64 MiB physical budget).
    block_bytes = row_tile * LANES * itemsize
    vmem_limit = int(min(48 << 20, max(32 << 20, 4 * block_bytes + (8 << 20))))

    kernel = _make_mse_partial_kernel(row_tile, m)

    partials = pl.pallas_call(
        kernel,
        out_shape=jax.ShapeDtypeStruct((num_blocks * SUBLANES, LANES), jnp.float32),
        grid_spec=pltpu.PrefetchScalarGridSpec(
            num_scalar_prefetch=0,
            grid=(num_blocks,),
            in_specs=[
                pl.BlockSpec((row_tile, LANES), lambda i: (i, 0)),
                pl.BlockSpec((row_tile, LANES), lambda i: (i, 0)),
            ],
            out_specs=pl.BlockSpec((SUBLANES, LANES), lambda i: (i, 0)),
        ),
        compiler_params=pltpu.CompilerParams(
            # Partial sums are independent per block -> safe to shard across
            # TensorCores; no cross-step accumulator carry.
            dimension_semantics=("parallel",),
            vmem_limit_bytes=vmem_limit,
        ),
        cost_estimate=pl.CostEstimate(
            flops=3 * n_elems,
            transcendentals=0,
            bytes_accessed=2 * n_elems * itemsize + num_blocks * SUBLANES * LANES * 4,
        ),
    )(a2, b2)

    # Tiny final reduction + mean in plain JAX (negligible vs the bandwidth-bound kernel).
    loss = jnp.sum(partials) / jnp.float32(n_elems)
    # Match PyTorch's output dtype (intentional downcast if inputs are bf16).
    return loss.astype(latent.dtype)


# TODO(synk): nn.CosineSimilarity is instantiated in __init__ but never used in
# forward(), so it is intentionally not implemented.


if __name__ == "__main__":
    key = jax.random.PRNGKey(0)
    k1, k2, k3, k4 = jax.random.split(key, 4)

    # Primary test: small NCHW latents (single-block, sub-chunk fold path).
    latent = jax.random.normal(k1, (2, 4, 16, 16), dtype=jnp.float32)
    latent_hr = jax.random.normal(k2, (2, 4, 16, 16), dtype=jnp.float32)
    loss = encoder_loss(latent, latent_hr)
    jax.block_until_ready(loss)
    ref = jnp.mean((latent - latent_hr) ** 2)
    assert jnp.allclose(loss, ref, rtol=1e-5, atol=1e-6), (loss, ref)

    # Chunked fori_loop fold path: m = 2112 rows -> single 8192-row f32 block,
    # 8 full 256-row chunks + a 64-row remainder fold.
    a1 = jax.random.normal(k3, (4, 4, 132, 128), dtype=jnp.float32)
    b1 = jax.random.normal(k4, (4, 4, 132, 128), dtype=jnp.float32)
    ref1 = jnp.mean((a1 - b1) ** 2)
    loss1 = encoder_loss(a1, b1)
    jax.block_until_ready(loss1)
    assert jnp.allclose(loss1, ref1, rtol=1e-5, atol=1e-6), (loss1, ref1)

    # Multi-block + pl.when tail path: cap the tile at 256 rows -> 9 grid steps
    # (8 full blocks + one 64-row partial block handled by the gated branch).
    loss2 = encoder_loss(a1, b1, max_tile_rows=256)
    jax.block_until_ready(loss2)
    assert jnp.allclose(loss2, ref1, rtol=1e-5, atol=1e-6), (loss2, ref1)

    # Native-bf16 path (half HBM traffic, f32 accumulation, bf16 output like PyTorch).
    a_bf = a1.astype(jnp.bfloat16)
    b_bf = b1.astype(jnp.bfloat16)
    loss_bf = encoder_loss(a_bf, b_bf)
    jax.block_until_ready(loss_bf)
    ref_bf = jnp.mean((a_bf.astype(jnp.float32) - b_bf.astype(jnp.float32)) ** 2)
    assert jnp.allclose(loss_bf.astype(jnp.float32), ref_bf, rtol=2e-2, atol=2e-2), (loss_bf, ref_bf)

    print("KERNEL_OK")
</pallas_src>

<mosaic_0001>
module attributes {stable_mosaic.version = 11 : i64} {
  func.func @kernel(%arg0: i32, %arg1: memref<16x128xf32, #tpu.memory_space<vmem>>, %arg2: memref<16x128xf32, #tpu.memory_space<vmem>>, %arg3: memref<8x128xf32, #tpu.memory_space<vmem>>) attributes {dimension_semantics = [#tpu.dimension_semantics<parallel>], iteration_bounds = array<i64: 1>, scalar_prefetch = 0 : i64, scratch_operands = 0 : i64, tpu.core_type = #tpu.core_type<tc>, window_params = [{transform_indices = @transform_0, window_bounds = array<i64: 16, 128>}, {transform_indices = @transform_1, window_bounds = array<i64: 16, 128>}, {transform_indices = @transform_2, window_bounds = array<i64: 8, 128>}]} {
    %cst = arith.constant 0.000000e+00 : f32
    %0 = vector.broadcast %cst : f32 to vector<8x128xf32>
    %c0 = arith.constant 0 : index
    %c0_0 = arith.constant 0 : index
    %1 = vector.load %arg1[%c0, %c0_0] : memref<16x128xf32, #tpu.memory_space<vmem>>, vector<16x128xf32>
    %c0_1 = arith.constant 0 : index
    %c0_2 = arith.constant 0 : index
    %2 = vector.load %arg2[%c0_1, %c0_2] : memref<16x128xf32, #tpu.memory_space<vmem>>, vector<16x128xf32>
    %3 = arith.subf %1, %2 : vector<16x128xf32>
    %4 = arith.mulf %3, %3 : vector<16x128xf32>
    %5 = vector.shape_cast %4 : vector<16x128xf32> to vector<2x8x128xf32>
    %cst_3 = arith.constant dense<0.000000e+00> : vector<8x128xf32>
    %6 = vector.multi_reduction <add>, %5, %cst_3 [0] : vector<2x8x128xf32> to vector<8x128xf32>
    %7 = arith.addf %0, %6 : vector<8x128xf32>
    %c0_4 = arith.constant 0 : index
    %c0_5 = arith.constant 0 : index
    %8 = vector.load %arg3[%c0_4, %c0_5] : memref<8x128xf32, #tpu.memory_space<vmem>>, vector<8x128xf32>
    tpu.vector_store %arg3[%c0_4, %c0_5], %7 {strides = array<i32>} : memref<8x128xf32, #tpu.memory_space<vmem>>, vector<8x128xf32>,
    return
  }
  func.func @transform_0(%arg0: i32) -> (i32, i32) {
    %c0_i32 = arith.constant 0 : i32
    %c0_i32_0 = arith.constant 0 : i32
    return %arg0, %c0_i32 : i32, i32
  }
  func.func @transform_1(%arg0: i32) -> (i32, i32) {
    %c0_i32 = arith.constant 0 : i32
    %c0_i32_0 = arith.constant 0 : i32
    return %arg0, %c0_i32 : i32, i32
  }
  func.func @transform_2(%arg0: i32) -> (i32, i32) {
    %c0_i32 = arith.constant 0 : i32
    %c0_i32_0 = arith.constant 0 : i32
    return %arg0, %c0_i32 : i32, i32
  }
}

</mosaic_0001>

<llo_original>
// kernel: tpu_custom_call.1
$region0: #{tpu_custom_call.1}
  #allocation0 [shape = 'u32[]', space=smem, size = 0x4, offset = 0x4, fixed_abs, tag = 'smem constant byte address 0x4 - core index']
  #allocation1 [shape = 'u32[144,128]{1,0:T(1,128)}', space=vmem, size = 0x12000, scoped, tag = 'internal scratch']
  %s0 = inlined_call_operand.hbm [shape: f32[16,128], index: 0, kind: input, shape index: {}]
  %s1 = inlined_call_operand.hbm [shape: f32[16,128], index: 1, kind: input, shape index: {}]
  %s2 = inlined_call_operand.hbm [shape: f32[8,128], index: 2, kind: output, shape index: {}]
  %s3 = sld [smem:[#allocation0]]
  $region26: #{tpu_custom_call.1} parent=0
    _
  %s5 = ssub.s32 1, %s3
  %s6 = scalar_select 0, %s5, %s3
  $region1: #{tpu_custom_call.1} parent=0
    #allocation2 [shape = 'u8[8192]{0}', space=vmem, size = 0x2000, scoped, tag = 'input window, operand 0, single buffered']
    #allocation3 [shape = 's32[1]{0}', space=sflag, size = 0x4, scoped, tag = 'scoped memory for tpu_custom_call.1']
    #allocation4 [shape = 's32[1]{0}', space=sflag, size = 0x4, scoped, tag = 'scoped memory for tpu_custom_call.1']
    #allocation5 [shape = 'u8[8192]{0}', space=vmem, size = 0x2000, scoped, tag = 'input window, operand 1, single buffered']
    #allocation6 [shape = 's32[1]{0}', space=sflag, size = 0x4, scoped, tag = 'scoped memory for tpu_custom_call.1']
    #allocation7 [shape = 'u8[4096]{0}', space=vmem, size = 0x1000, scoped, tag = 'output window, operand 0, single buffered']
    %7 = vsyncpa [#allocation3], 0
    %8 = vsyncpa [#allocation6], 0
    %9 = vsyncpa [#allocation4], 0
    // Predicated region
    $region2: #{tpu_custom_call.1} parent=1 // pred_check
      _
    $region3: #{tpu_custom_call.1} parent=1 // pred_check_branch
      %11 = sbr.rel (0) target = $region5
    $region4: #{tpu_custom_call.1} parent=1 // pred_region
      %s13 = ssub.s32 256, 256
      %14 = vsyncadd [#allocation3], %s13
      %s15 = sshll.u32 [#allocation2], 4
      %s16 = int_to_ptr.vmem [resolvable:$true] %s15
      %21 = dma.hbm_to_vmem [thread:$0]  %s0, 256, %s16, [#allocation3], 128, 128, 8
    $region5: #{tpu_custom_call.1} parent=1 // pred_fallthru
      _
    // Predicated region
    $region6: #{tpu_custom_call.1} parent=1 // pred_check
      _
    $region7: #{tpu_custom_call.1} parent=1 // pred_check_branch
      %23 = sbr.rel (0) target = $region9
    $region8: #{tpu_custom_call.1} parent=1 // pred_region
      %s25 = ssub.s32 256, 256
      %26 = vsyncadd [#allocation6], %s25
      %s27 = sshll.u32 [#allocation5], 4
      %s28 = int_to_ptr.vmem [resolvable:$true] %s27
      %33 = dma.hbm_to_vmem [thread:$0]  %s1, 256, %s28, [#allocation6], 128, 128, 8
    $region9: #{tpu_custom_call.1} parent=1 // pred_fallthru
      _
    // Predicated region
    $region10: #{tpu_custom_call.1} parent=1 // pred_check
      _
    $region11: #{tpu_custom_call.1} parent=1 // pred_check_branch
      %35 = sbr.rel (0) target = $region13
    $region12: #{tpu_custom_call.1} parent=1 // pred_region
      %36 = dma.done [#allocation3], 256
    $region13: #{tpu_custom_call.1} parent=1 // pred_fallthru
      _
    // Predicated region
    $region14: #{tpu_custom_call.1} parent=1 // pred_check
      _
    $region15: #{tpu_custom_call.1} parent=1 // pred_check_branch
      %38 = sbr.rel (0) target = $region17
    $region16: #{tpu_custom_call.1} parent=1 // pred_region
      %39 = dma.done [#allocation6], 256
    $region17: #{tpu_custom_call.1} parent=1 // pred_fallthru
      _
    %v40 = vld [vmem:[#allocation2] sm:$0xff]
    %v41 = vld [vmem:[#allocation2 + $0x8] sm:$0xff]
    %v42 = vld [vmem:[#allocation5] sm:$0xff]
    %v43 = vld [vmem:[#allocation5 + $0x8] sm:$0xff]
    %v44 = vsub.f32 %v40, %v42
    %v45 = vsub.f32 %v41, %v43
    %v46 = vmul.f32 %v44, %v44
    %v47 = vmul.f32 %v45, %v45
    %v48 = vadd.f32 %v46, %v47
    %v49 = vadd.f32 %v48, 0.0
    %50 = vst [vmem:[#allocation7] sm:$0xff] %v49
    // Predicated region
    $region18: #{tpu_custom_call.1} parent=1 // pred_check
      _
    $region19: #{tpu_custom_call.1} parent=1 // pred_check_branch
      %52 = sbr.rel (0) target = $region21
    $region20: #{tpu_custom_call.1} parent=1 // pred_region
      %s54 = ssub.s32 128, 128
      %55 = vsyncadd [#allocation4], %s54
      %s57 = sshll.u32 [#allocation7], 4
      %s58 = int_to_ptr.vmem [resolvable:$true] %s57
      %60 = dma.vmem_to_hbm [thread:$0]  %s58, 128, %s2, [#allocation4]
    $region21: #{tpu_custom_call.1} parent=1 // pred_fallthru
      _
    // Predicated region
    $region22: #{tpu_custom_call.1} parent=1 // pred_check
      _
    $region23: #{tpu_custom_call.1} parent=1 // pred_check_branch
      %62 = sbr.rel (0) target = $region25
    $region24: #{tpu_custom_call.1} parent=1 // pred_region
      %63 = dma.done [#allocation4], 128
    $region25: #{tpu_custom_call.1} parent=1 // pred_fallthru
      _
    %64 = vsyncpa [#allocation3], 1
    %65 = vsyncpa [#allocation6], 1
    %66 = vsyncpa [#allocation4], 1

</llo_original>
